<compile_context>
chip_gen: v5e
topology: v5e:2x2
jax: 0.10.0
libtpu: 0.0.40
codegen_flags: <defaults>
</compile_context>

<pallas_src>
import math

import jax
import jax.numpy as jnp
from jax.experimental import pallas as pl
from jax.experimental.pallas import tpu as pltpu


def _flatten_head_kernel(x_ref, w_ref, b_ref, o_ref, acc_ref):
    """Accumulating tile matmul + fused bias add.

    x:(tm, tk)  w:(tk, tw)  b:(1, tw)  o:(tm, tw)  acc:(tm, tw) f32 scratch.
    """
    k = pl.program_id(1)

    @pl.when(k == 0)
    def _():
        acc_ref[...] = jnp.zeros_like(acc_ref)

    x = x_ref[...].astype(jnp.bfloat16)            # bf16 MXU operands (v6e/v7x native)
    w = w_ref[...].astype(jnp.bfloat16)
    acc_ref[...] += jnp.dot(x, w, preferred_element_type=jnp.float32)  # f32 accumulation

    @pl.when(k == pl.num_programs(1) - 1)
    def _():
        # Bias add in f32, single writeback of the finished tile.
        o_ref[...] = (acc_ref[...] + b_ref[...]).astype(o_ref.dtype)


def _pick_k_tile(nf, cap=1024):
    """Largest 128-multiple divisor of nf not exceeding `cap` (else full nf).

    Only exact divisors are used so the K (reduction) axis never has a ragged edge:
    out-of-bounds garbage on a reduction tile would be *added* into the accumulator.
    """
    if nf <= cap:
        return nf
    for tk in range(cap - cap % 128, 127, -128):
        if nf % tk == 0:
            return tk
    return nf


def flatten_head_forward(x, w, b, *, row_tile=256, k_tile_cap=1024):
    """FlattenHead forward.

    x: (B, n_vars, d_model, patch_num) float32
    w: (nf, target_window), nf = d_model * patch_num
    b: (target_window,)
    returns: (B, n_vars, target_window) float32
    """
    B, C, D, P = x.shape
    nf = D * P
    tw = w.shape[1]
    assert w.shape[0] == nf and b.shape == (tw,)

    # nn.Flatten(start_dim=-2) on a contiguous tensor is a row-major view -> a plain
    # reshape here (pure layout, no compute); rows are the B * n_vars series.
    xf = x.reshape(B * C, nf)
    M = B * C

    # Row tiling: whole-array block at small M; 8-sublane-aligned tiles when large so
    # the (8, 128) block constraint holds and the grid can pipeline / megacore-shard.
    tm = M if M <= row_tile else (row_tile // 8) * 8
    tk = _pick_k_tile(nf, k_tile_cap)
    grid = (pl.cdiv(M, tm), nf // tk)

    out = pl.pallas_call(
        _flatten_head_kernel,
        grid=grid,
        in_specs=[
            pl.BlockSpec((tm, tk), lambda i, k: (i, k)),   # activations: row + K tiled
            pl.BlockSpec((tk, tw), lambda i, k: (k, 0)),   # weight: K tiled, rows resident
            pl.BlockSpec((1, tw), lambda i, k: (0, 0)),    # bias: resident
        ],
        out_specs=pl.BlockSpec((tm, tw), lambda i, k: (i, 0)),
        out_shape=jax.ShapeDtypeStruct((M, tw), jnp.float32),
        scratch_shapes=[pltpu.VMEM((tm, tw), jnp.float32)],
        compiler_params=pltpu.CompilerParams(
            # rows shard across TensorCores (v7x); K is a sequential reduction.
            dimension_semantics=("parallel", "arbitrary"),
        ),
    )(xf, w, b.reshape(1, tw))

    # nn.Dropout(head_dropout=0) / eval mode == identity -> no kernel needed.
    return out.reshape(B, C, tw)


if __name__ == "__main__":
    key = jax.random.PRNGKey(0)
    k_x, k_w, k_b = jax.random.split(key, 3)

    # PatchTST-style head shapes: batch=2, n_vars=4, d_model=32, patch_num=4
    # -> nf = 128 (lane-aligned), target_window (pred_len) = 8.
    B, C, D, P = 2, 4, 32, 4
    TW = 8
    NF = D * P

    x = jax.random.normal(k_x, (B, C, D, P), jnp.float32)
    bound = 1.0 / math.sqrt(NF)                      # nn.Linear default init range
    w = jax.random.uniform(k_w, (NF, TW), jnp.float32, -bound, bound)
    b = jax.random.uniform(k_b, (TW,), jnp.float32, -bound, bound)

    out = jax.block_until_ready(flatten_head_forward(x, w, b))

    assert out.shape == (B, C, TW), out.shape
    assert bool(jnp.all(jnp.isfinite(out)))

    # Cross-check against the plain-JAX reference (tolerance for bf16 matmul operands).
    ref = x.reshape(B, C, NF) @ w + b
    assert bool(jnp.allclose(out, ref, atol=5e-2, rtol=5e-2)), (
        float(jnp.max(jnp.abs(out - ref))))

    print("KERNEL_OK")
</pallas_src>

<mosaic_0001>
module attributes {stable_mosaic.version = 11 : i64} {
  func.func @_flatten_head_kernel(%arg0: i32, %arg1: i32, %arg2: memref<8x128xf32, #tpu.memory_space<vmem>>, %arg3: memref<128x8xf32, #tpu.memory_space<vmem>>, %arg4: memref<1x8xf32, #tpu.memory_space<vmem>>, %arg5: memref<8x8xf32, #tpu.memory_space<vmem>>, %arg6: memref<8x8xf32, #tpu.memory_space<vmem>>) attributes {dimension_semantics = [#tpu.dimension_semantics<parallel>, #tpu.dimension_semantics<arbitrary>], iteration_bounds = array<i64: 1, 1>, scalar_prefetch = 0 : i64, scratch_operands = 1 : i64, tpu.core_type = #tpu.core_type<tc>, window_params = [{transform_indices = @transform_0, window_bounds = array<i64: 8, 128>}, {transform_indices = @transform_1, window_bounds = array<i64: 128, 8>}, {pipeline_mode = #tpu.pipeline_mode<synchronous>, transform_indices = @transform_2, window_bounds = array<i64: 1, 8>}, {transform_indices = @transform_3, window_bounds = array<i64: 8, 8>}]} {
    %c0_i32 = arith.constant 0 : i32
    %0 = arith.cmpi eq, %arg1, %c0_i32 : i32
    %1 = arith.extui %0 : i1 to i32
    %c0_i32_0 = arith.constant 0 : i32
    %2 = arith.cmpi ne, %1, %c0_i32_0 : i32
    scf.if %2 {
      %cst_10 = arith.constant 0.000000e+00 : f32
      %14 = vector.broadcast %cst_10 : f32 to vector<8x8xf32>
      %c0_11 = arith.constant 0 : index
      %c0_12 = arith.constant 0 : index
      %15 = vector.load %arg6[%c0_11, %c0_12] : memref<8x8xf32, #tpu.memory_space<vmem>>, vector<8x8xf32>
      tpu.vector_store %arg6[%c0_11, %c0_12], %14 {strides = array<i32>} : memref<8x8xf32, #tpu.memory_space<vmem>>, vector<8x8xf32>,
    } else {
    }
    %c0 = arith.constant 0 : index
    %c0_1 = arith.constant 0 : index
    %3 = vector.load %arg2[%c0, %c0_1] : memref<8x128xf32, #tpu.memory_space<vmem>>, vector<8x128xf32>
    %4 = arith.truncf %3 : vector<8x128xf32> to vector<8x128xbf16>
    %c0_2 = arith.constant 0 : index
    %c0_3 = arith.constant 0 : index
    %5 = vector.load %arg3[%c0_2, %c0_3] : memref<128x8xf32, #tpu.memory_space<vmem>>, vector<128x8xf32>
    %6 = arith.truncf %5 : vector<128x8xf32> to vector<128x8xbf16>
    %c0_4 = arith.constant 0 : index
    %c0_5 = arith.constant 0 : index
    %7 = vector.load %arg6[%c0_4, %c0_5] : memref<8x8xf32, #tpu.memory_space<vmem>>, vector<8x8xf32>
    %cst = arith.constant dense<0.000000e+00> : vector<8x8xf32>
    %8 = tpu.matmul %4, %6, %cst {dimension_numbers = #tpu.dot_dimension_numbers<[1], [0], [0], [1], [0, 0, 1, 1], [], []>} : vector<8x128xbf16>, vector<128x8xbf16>, vector<8x8xf32> -> vector<8x8xf32>
    %9 = arith.addf %7, %8 : vector<8x8xf32>
    %c0_6 = arith.constant 0 : index
    %c0_7 = arith.constant 0 : index
    %10 = vector.load %arg6[%c0_6, %c0_7] : memref<8x8xf32, #tpu.memory_space<vmem>>, vector<8x8xf32>
    tpu.vector_store %arg6[%c0_6, %c0_7], %9 {strides = array<i32>} : memref<8x8xf32, #tpu.memory_space<vmem>>, vector<8x8xf32>,
    %c0_i32_8 = arith.constant 0 : i32
    %11 = arith.cmpi eq, %arg1, %c0_i32_8 : i32
    %12 = arith.extui %11 : i1 to i32
    %c0_i32_9 = arith.constant 0 : i32
    %13 = arith.cmpi ne, %12, %c0_i32_9 : i32
    scf.if %13 {
      %c0_10 = arith.constant 0 : index
      %c0_11 = arith.constant 0 : index
      %14 = vector.load %arg6[%c0_10, %c0_11] : memref<8x8xf32, #tpu.memory_space<vmem>>, vector<8x8xf32>
      %c0_12 = arith.constant 0 : index
      %c0_13 = arith.constant 0 : index
      %15 = vector.load %arg4[%c0_12, %c0_13] : memref<1x8xf32, #tpu.memory_space<vmem>>, vector<1x8xf32>
      %16 = vector.broadcast %15 : vector<1x8xf32> to vector<8x8xf32>
      %17 = arith.addf %14, %16 : vector<8x8xf32>
      %c0_14 = arith.constant 0 : index
      %c0_15 = arith.constant 0 : index
      %18 = vector.load %arg5[%c0_14, %c0_15] : memref<8x8xf32, #tpu.memory_space<vmem>>, vector<8x8xf32>
      tpu.vector_store %arg5[%c0_14, %c0_15], %17 {strides = array<i32>} : memref<8x8xf32, #tpu.memory_space<vmem>>, vector<8x8xf32>,
    } else {
    }
    return
  }
  func.func @transform_0(%arg0: i32, %arg1: i32) -> (i32, i32) {
    %c0_i32 = arith.constant 0 : i32
    return %arg0, %arg1 : i32, i32
  }
  func.func @transform_1(%arg0: i32, %arg1: i32) -> (i32, i32) {
    %c0_i32 = arith.constant 0 : i32
    %c0_i32_0 = arith.constant 0 : i32
    return %arg1, %c0_i32 : i32, i32
  }
  func.func @transform_2(%arg0: i32, %arg1: i32) -> (i32, i32) {
    %c0_i32 = arith.constant 0 : i32
    %c0_i32_0 = arith.constant 0 : i32
    %c0_i32_1 = arith.constant 0 : i32
    return %c0_i32, %c0_i32_0 : i32, i32
  }
  func.func @transform_3(%arg0: i32, %arg1: i32) -> (i32, i32) {
    %c0_i32 = arith.constant 0 : i32
    %c0_i32_0 = arith.constant 0 : i32
    return %arg0, %c0_i32 : i32, i32
  }
}

</mosaic_0001>

<llo_original>
// kernel: tpu_custom_call.1
$region0: #{tpu_custom_call.1}
  #allocation0 [shape = 'u32[]', space=smem, size = 0x4, offset = 0x4, fixed_abs, tag = 'smem constant byte address 0x4 - core index']
  #allocation1 [shape = 'u32[72,128]{1,0:T(1,128)}', space=vmem, size = 0x9000, scoped, tag = 'internal scratch']
  #allocation2 [shape = 'f32[8,8]{1,0:T(8,128)}', space=vmem, size = 0x1000, scoped, tag = 'scratch operand']
  %s0 = inlined_call_operand.vmem [shape: f32[8,128], index: 0, kind: input, shape index: {}]
  %s1 = inlined_call_operand.vmem [shape: f32[128,8], index: 1, kind: input, shape index: {}]
  %s2 = inlined_call_operand.vmem [shape: f32[1,8], index: 2, kind: input, shape index: {}]
  %s3 = inlined_call_operand.hbm [shape: f32[8,8], index: 3, kind: output, shape index: {}]
  %s4 = sld [smem:[#allocation0]]
  $region30: #{tpu_custom_call.1} parent=0
    _
  %s6 = ssub.s32 1, %s4
  %s7 = scalar_select 0, %s6, %s4
  $region1: #{tpu_custom_call.1} parent=0
    #allocation3 [shape = 'u8[4096]{0}', space=vmem, size = 0x1000, scoped, tag = 'output window, operand 0, single buffered']
    #allocation4 [shape = 's32[1]{0}', space=sflag, size = 0x4, scoped, tag = 'scoped memory for tpu_custom_call.1']
    %8 = vsyncpa [#allocation4], 0
    // Predicated region
    $region2: #{tpu_custom_call.1} parent=1 // pred_check
      _
    $region3: #{tpu_custom_call.1} parent=1 // pred_check_branch
      %10 = sbr.rel (0) target = $region5
    $region4: #{tpu_custom_call.1} parent=1 // pred_region
      _
    $region5: #{tpu_custom_call.1} parent=1 // pred_fallthru
      _
    // Predicated region
    $region6: #{tpu_custom_call.1} parent=1 // pred_check
      _
    $region7: #{tpu_custom_call.1} parent=1 // pred_check_branch
      %12 = sbr.rel (0) target = $region9
    $region8: #{tpu_custom_call.1} parent=1 // pred_region
      _
    $region9: #{tpu_custom_call.1} parent=1 // pred_fallthru
      _
    // Predicated region
    $region10: #{tpu_custom_call.1} parent=1 // pred_check
      _
    $region11: #{tpu_custom_call.1} parent=1 // pred_check_branch
      %14 = sbr.rel (0) target = $region13
    $region12: #{tpu_custom_call.1} parent=1 // pred_region
      _
    $region13: #{tpu_custom_call.1} parent=1 // pred_fallthru
      _
    %p15 = scmp.eq.s32.totalorder 0, 0
    // Predicated region
    $region14: #{tpu_custom_call.1} parent=1 // pred_check
      %p16 = pneg %p15
    $region15: #{tpu_custom_call.1} parent=1 // pred_check_branch
      %18 = sbr.rel (%p16) target = $region17
    $region16: #{tpu_custom_call.1} parent=1 // pred_region
      %vm19 = vcmask 64512
      %20 = vst.msk [vmem:[#allocation2] sm:$0xff] %vm19, 0.0
    $region17: #{tpu_custom_call.1} parent=1 // pred_fallthru
      _
    %v21 = vld [vmem:[%s0] sm:$0xff]
    %v22 = vpack.c.bf16 %v21, %v21
    %v23 = vld [vmem:[%s1] sm:$0xff]
    %v24 = vld [vmem:[%s1 + $0x8] sm:$0xff]
    %v25 = vld [vmem:[%s1 + $0x10] sm:$0xff]
    %v26 = vld [vmem:[%s1 + $0x18] sm:$0xff]
    %v27 = vld [vmem:[%s1 + $0x20] sm:$0xff]
    %v28 = vld [vmem:[%s1 + $0x28] sm:$0xff]
    %v29 = vld [vmem:[%s1 + $0x30] sm:$0xff]
    %v30 = vld [vmem:[%s1 + $0x38] sm:$0xff]
    %v31 = vld [vmem:[%s1 + $0x40] sm:$0xff]
    %v32 = vld [vmem:[%s1 + $0x48] sm:$0xff]
    %v33 = vld [vmem:[%s1 + $0x50] sm:$0xff]
    %v34 = vld [vmem:[%s1 + $0x58] sm:$0xff]
    %v35 = vld [vmem:[%s1 + $0x60] sm:$0xff]
    %v36 = vld [vmem:[%s1 + $0x68] sm:$0xff]
    %v37 = vld [vmem:[%s1 + $0x70] sm:$0xff]
    %v38 = vld [vmem:[%s1 + $0x78] sm:$0xff]
    %v39 = vpack.c.bf16 %v24, %v23
    %v40 = vpack.c.bf16 %v26, %v25
    %v41 = vpack.c.bf16 %v28, %v27
    %v42 = vpack.c.bf16 %v30, %v29
    %v43 = vpack.c.bf16 %v32, %v31
    %v44 = vpack.c.bf16 %v34, %v33
    %v45 = vpack.c.bf16 %v36, %v35
    %v46 = vpack.c.bf16 %v38, %v37
    %v47 = vld [vmem:[#allocation2] sm:$0xff]
    %48 = vmatpush.bf16.msra.mxu0 %v46
    %49 = vmatpush.bf16.msra.mxu0 %v45
    %50 = vmatpush.bf16.msra.mxu0 %v44
    %51 = vmatpush.bf16.msra.mxu0 %v43
    %52 = vmatpush.bf16.msra.mxu0 %v42
    %53 = vmatpush.bf16.msra.mxu0 %v41
    %54 = vmatpush.bf16.msra.mxu0 %v40
    %55 = vmatpush.bf16.msra.mxu0 %v39
    %56 = vmatmul.bf16.gmra.mxu0 %v22
    %v57 = vpop.f32.mrf.mxu0
    %v58 = vadd.f32 0.0, %v57
    %v59 = vpop.f32.mrf.mxu0
    %60 = vdwg.mxu0
    %v61 = vadd.f32 %v47, %v58
    %vm62 = vcmask 64512
    %63 = vst.msk [vmem:[#allocation2] sm:$0xff] %vm62, %v61
    // Predicated region
    $region18: #{tpu_custom_call.1} parent=1 // pred_check
      %p64 = pneg %p15
    $region19: #{tpu_custom_call.1} parent=1 // pred_check_branch
      %66 = sbr.rel (%p64) target = $region21
    $region20: #{tpu_custom_call.1} parent=1 // pred_region
      %v67 = vld [vmem:[#allocation2] sm:$0xff]
      %v68 = vld [vmem:[%s2] sm:$0x1]
      %v70 = vperm.slane %v68, 0
      %v72 = vadd.f32 %v67, %v70
      %73 = vst.msk [vmem:[#allocation3] sm:$0xff] %vm62, %v72
    $region21: #{tpu_custom_call.1} parent=1 // pred_fallthru
      _
    // Predicated region
    $region22: #{tpu_custom_call.1} parent=1 // pred_check
      _
    $region23: #{tpu_custom_call.1} parent=1 // pred_check_branch
      %75 = sbr.rel (0) target = $region25
    $region24: #{tpu_custom_call.1} parent=1 // pred_region
      %77 = vsyncadd [#allocation4], 0
      %s79 = sshll.u32 [#allocation3], 4
      %s80 = int_to_ptr.vmem [resolvable:$true] %s79
      %s81 = sshll.u32 %s3, 4
      %s82 = int_to_ptr.hbm [resolvable:$true] %s81
      %84 = dma.vmem_to_hbm [thread:$0]  %s80, 128, %s82, [#allocation4]
    $region25: #{tpu_custom_call.1} parent=1 // pred_fallthru
      _
    // Predicated region
    $region26: #{tpu_custom_call.1} parent=1 // pred_check
      _
    $region27: #{tpu_custom_call.1} parent=1 // pred_check_branch
      %86 = sbr.rel (0) target = $region29
    $region28: #{tpu_custom_call.1} parent=1 // pred_region
      %88 = dma.done [#allocation4], 128
    $region29: #{tpu_custom_call.1} parent=1 // pred_fallthru
      _
    %89 = vsyncpa [#allocation4], 1

</llo_original>
